<compile_context>
chip_gen: v7x
topology: tpu7x:2x2x1
jax: 0.10.0
libtpu: 0.0.40
codegen_flags: <defaults>
</compile_context>

<pallas_src>
import functools
import math

import jax
import jax.numpy as jnp
from jax.experimental import pallas as pl
from jax.experimental.pallas import tpu as pltpu

SUBLANE_F32 = 8     # f32: 8 rows per sublane tile
SUBLANE_BF16 = 16   # bf16 packs two rows per sublane -> 16-row alignment


def _round_up(x, m):
    return ((x + m - 1) // m) * m


def _num_tensorcores():
    """TensorCores per chip: 2 for v4/v5p/v7x style chips, 1 for v5e/v6e."""
    try:
        kind = jax.devices()[0].device_kind.lower()
    except Exception:
        return 1
    if any(tag in kind for tag in ("v7", "v5p", "v4")):
        return 2
    return 1


# ----------------------------- kernel ---------------------------------------


def _mlp_kernel(x_ref, w1_ref, b1_ref, w2_ref, b2_ref, w3_ref, b3_ref, o_ref):
    """fc1 -> ReLU -> fc2 -> ReLU -> fc3; accumulation and bias-add stay in f32."""
    x = x_ref[...]
    if x.dtype != w1_ref.dtype:          # bf16 compute path: cast inside the kernel
        x = x.astype(w1_ref.dtype)       # (no wrapper-side cast op / HBM round trip)

    h1 = jnp.dot(x, w1_ref[...], preferred_element_type=jnp.float32) + b1_ref[...]
    h1 = jnp.maximum(h1, 0.0)
    if h1.dtype != w2_ref.dtype:
        h1 = h1.astype(w2_ref.dtype)

    h2 = jnp.dot(h1, w2_ref[...], preferred_element_type=jnp.float32) + b2_ref[...]
    h2 = jnp.maximum(h2, 0.0)
    if h2.dtype != w3_ref.dtype:
        h2 = h2.astype(w3_ref.dtype)

    # Output block last dim == n_actions == full array dim -> legal BlockSpec, no
    # 128-lane zero padding, and the (tb, n_actions) tile is a contiguous HBM slab.
    o_ref[...] = (jnp.dot(h2, w3_ref[...], preferred_element_type=jnp.float32)
                  + b3_ref[...])


@functools.partial(jax.jit, static_argnames=("tb", "b_pad"))
def _pallas_forward(x, w1, b1, w2, b2, w3, b3, *, tb, b_pad):
    B, d_in = x.shape
    f1 = w1.shape[1]
    f2 = w2.shape[1]
    n_actions = w3.shape[1]

    if b_pad != B:
        x_p = jnp.zeros((b_pad, d_in), x.dtype).at[:B, :].set(x)
    else:
        x_p = x

    grid = (b_pad // tb,)

    # Scheduling hint: this is a tiny op.
    flops = 2 * b_pad * (d_in * f1 + f1 * f2 + f2 * n_actions)
    bytes_accessed = (
        x_p.size * x_p.dtype.itemsize
        + sum(a.size * a.dtype.itemsize for a in (w1, b1, w2, b2, w3, b3))
        + b_pad * n_actions * 4
    )
    cost = pl.CostEstimate(flops=flops, transcendentals=0,
                           bytes_accessed=bytes_accessed)

    out_padded = pl.pallas_call(
        _mlp_kernel,
        out_shape=jax.ShapeDtypeStruct((b_pad, n_actions), jnp.float32),
        grid=grid,
        in_specs=[
            pl.BlockSpec((tb, d_in), lambda i: (i, 0)),        # x tile (pipelined)
            pl.BlockSpec((d_in, f1), lambda i: (0, 0)),        # w1 (resident)
            pl.BlockSpec((1, f1), lambda i: (0, 0)),           # b1
            pl.BlockSpec((f1, f2), lambda i: (0, 0)),          # w2
            pl.BlockSpec((1, f2), lambda i: (0, 0)),           # b2
            pl.BlockSpec((f2, n_actions), lambda i: (0, 0)),   # w3
            pl.BlockSpec((1, n_actions), lambda i: (0, 0)),    # b3
        ],
        out_specs=pl.BlockSpec((tb, n_actions), lambda i: (i, 0)),
        compiler_params=pltpu.CompilerParams(
            dimension_semantics=("parallel",)),
        cost_estimate=cost,
    )(x_p, w1, b1, w2, b2, w3, b3)

    return out_padded[:B, :]


# ----------------------------- wrapper ---------------------------------------


def prepare_params(params, compute_dtype=jnp.float32):
    """One-time kernel-ready param prep (hoisted out of the per-call path).

    Casts the weight matrices to `compute_dtype`; biases stay float32 (accumulation
    and bias-add are always f32 in the kernel). bf16 is MXU-native on all recent
    generations; keep the default f32 on v5e because its VPU has no bf16 path.
    """
    w1, b1, w2, b2, w3, b3 = params
    return (w1.astype(compute_dtype), b1.astype(jnp.float32),
            w2.astype(compute_dtype), b2.astype(jnp.float32),
            w3.astype(compute_dtype), b3.astype(jnp.float32))


def _reference_forward(x, params):
    w1, b1, w2, b2, w3, b3 = params
    h1 = jnp.maximum(jnp.dot(x, w1.astype(x.dtype)) + b1, 0.0)
    h2 = jnp.maximum(jnp.dot(h1, w2.astype(h1.dtype)) + b2, 0.0)
    return jnp.dot(h2, w3.astype(h2.dtype)) + b3


_jnp_forward = jax.jit(_reference_forward)


def generic_network_forward(x, prepared_params, *, block_b=None,
                            max_rows_per_tile=2048, num_cores=None,
                            fallback_batch_threshold=64):
    """Pallas forward pass of GenericNetwork.

    x               : [B, input_dim] (or [input_dim]) float32 observation.
    prepared_params : output of prepare_params() — weights already in compute dtype.
    block_b         : optional explicit rows-per-grid-step override.
    fallback_batch_threshold : batches smaller than this use a plain jnp path
                               (fixed pallas_call cost dominates tiny batches);
                               pass 0 to force the Pallas kernel.
    """
    squeeze = (x.ndim == 1)
    if squeeze:
        x = x[None, :]
    B = x.shape[0]

    if B < fallback_batch_threshold:
        out = _jnp_forward(x, prepared_params)
        return out[0] if squeeze else out

    w1, b1, w2, b2, w3, b3 = prepared_params
    if num_cores is None:
        num_cores = _num_tensorcores()
    align = SUBLANE_BF16 if w1.dtype == jnp.bfloat16 else SUBLANE_F32

    if block_b is not None:
        tb = _round_up(block_b, align)
    else:
        # Balanced, generation-aware tiling:
        #  * single-TC (v5e/v6e): one big tile -> zero per-step pipeline overhead
        #  * 2-TC (v4/v5p/v7x): >= 2 balanced tiles so "parallel" shards both cores
        min_tiles = num_cores if (num_cores > 1 and B >= num_cores * align) else 1
        n_tiles = max(min_tiles, pl.cdiv(B, max_rows_per_tile))
        if num_cores > 1:
            n_tiles = _round_up(n_tiles, num_cores)
        tb = _round_up(pl.cdiv(B, n_tiles), align)
    b_pad = _round_up(B, tb)

    out = _pallas_forward(x, w1, b1, w2, b2, w3, b3, tb=tb, b_pad=b_pad)
    return out[0] if squeeze else out


def init_generic_network(key, input_dim, fc1_dims, fc2_dims, n_actions):
    """Deterministic init mimicking nn.Linear default (U[-1/sqrt(fan_in), +]).
    Weights stored as [in, out] so the kernel computes y = x @ W + b directly."""
    def linear(k, fan_in, fan_out):
        kw, kb = jax.random.split(k)
        bound = 1.0 / math.sqrt(fan_in)
        w = jax.random.uniform(kw, (fan_in, fan_out), jnp.float32, -bound, bound)
        b = jax.random.uniform(kb, (1, fan_out), jnp.float32, -bound, bound)
        return w, b

    k1, k2, k3 = jax.random.split(key, 3)
    w1, b1 = linear(k1, input_dim, fc1_dims)
    w2, b2 = linear(k2, fc1_dims, fc2_dims)
    w3, b3 = linear(k3, fc2_dims, n_actions)
    return (w1, b1, w2, b2, w3, b3)


if __name__ == "__main__":
    # GenericNetwork(alpha, input_dims=[8], fc1_dims=32, fc2_dims=32, n_actions=4)
    B, input_dim, fc1_dims, fc2_dims, n_actions = 2, 8, 32, 32, 4

    key = jax.random.PRNGKey(0)
    k_params, k_obs = jax.random.split(key)

    params = init_generic_network(k_params, input_dim, fc1_dims, fc2_dims, n_actions)
    observation = jax.random.normal(k_obs, (B, input_dim), dtype=jnp.float32)
    ref = _reference_forward(observation, params)

    # Kernel-ready params prepared ONCE (hoisted out of the per-call path).
    params_f32 = prepare_params(params)                    # default on all gens
    params_bf16 = prepare_params(params, jnp.bfloat16)     # opt-in for v6e/v7x

    # --- f32 Pallas path, fallback disabled so the kernel actually runs at B=2 ---
    out = generic_network_forward(observation, params_f32, fallback_batch_threshold=0)
    out = jax.block_until_ready(out)
    assert out.shape == (B, n_actions)
    assert jnp.allclose(out, ref, atol=1e-5, rtol=1e-5)

    # --- default tiny-batch path takes the cheap jnp fallback (same numbers) ---
    out_fb = jax.block_until_ready(generic_network_forward(observation, params_f32))
    assert jnp.allclose(out_fb, ref, atol=1e-5, rtol=1e-5)

    # --- bf16 compute (f32 accumulation) through the kernel ---
    out_bf16 = generic_network_forward(observation, params_bf16,
                                       fallback_batch_threshold=0)
    out_bf16 = jax.block_until_ready(out_bf16)
    assert out_bf16.shape == (B, n_actions)
    assert jnp.allclose(out_bf16, ref, atol=5e-2, rtol=5e-2)

    # --- larger, non-aligned batch exercises the balanced batch-tiled grid ---
    big_B = 1024 + 3
    big_obs = jax.random.normal(jax.random.PRNGKey(1), (big_B, input_dim), jnp.float32)
    big_ref = _reference_forward(big_obs, params)
    big_out = jax.block_until_ready(generic_network_forward(big_obs, params_f32))
    assert big_out.shape == (big_B, n_actions)
    assert jnp.allclose(big_out, big_ref, atol=1e-4, rtol=1e-4)

    # --- explicit tile override (multiple grid steps even on a single-TC chip) ---
    big_out2 = jax.block_until_ready(
        generic_network_forward(big_obs, params_f32, block_b=256))
    assert jnp.allclose(big_out2, big_ref, atol=1e-4, rtol=1e-4)

    print("KERNEL_OK")
</pallas_src>

<mosaic_0001>
module attributes {stable_mosaic.version = 11 : i64} {
  func.func @_mlp_kernel(%arg0: i32, %arg1: memref<8x8xf32, #tpu.memory_space<vmem>>, %arg2: memref<8x32xf32, #tpu.memory_space<vmem>>, %arg3: memref<1x32xf32, #tpu.memory_space<vmem>>, %arg4: memref<32x32xf32, #tpu.memory_space<vmem>>, %arg5: memref<1x32xf32, #tpu.memory_space<vmem>>, %arg6: memref<32x4xf32, #tpu.memory_space<vmem>>, %arg7: memref<1x4xf32, #tpu.memory_space<vmem>>, %arg8: memref<8x4xf32, #tpu.memory_space<vmem>>) attributes {dimension_semantics = [#tpu.dimension_semantics<parallel>], iteration_bounds = array<i64: 1>, scalar_prefetch = 0 : i64, scratch_operands = 0 : i64, tpu.core_type = #tpu.core_type<tc>, window_params = [{transform_indices = @transform_0, window_bounds = array<i64: 8, 8>}, {pipeline_mode = #tpu.pipeline_mode<synchronous>, transform_indices = @transform_1, window_bounds = array<i64: 8, 32>}, {pipeline_mode = #tpu.pipeline_mode<synchronous>, transform_indices = @transform_2, window_bounds = array<i64: 1, 32>}, {pipeline_mode = #tpu.pipeline_mode<synchronous>, transform_indices = @transform_3, window_bounds = array<i64: 32, 32>}, {pipeline_mode = #tpu.pipeline_mode<synchronous>, transform_indices = @transform_4, window_bounds = array<i64: 1, 32>}, {pipeline_mode = #tpu.pipeline_mode<synchronous>, transform_indices = @transform_5, window_bounds = array<i64: 32, 4>}, {pipeline_mode = #tpu.pipeline_mode<synchronous>, transform_indices = @transform_6, window_bounds = array<i64: 1, 4>}, {transform_indices = @transform_7, window_bounds = array<i64: 8, 4>}]} {
    %c0 = arith.constant 0 : index
    %c0_0 = arith.constant 0 : index
    %0 = vector.load %arg1[%c0, %c0_0] : memref<8x8xf32, #tpu.memory_space<vmem>>, vector<8x8xf32>
    %c0_1 = arith.constant 0 : index
    %c0_2 = arith.constant 0 : index
    %1 = vector.load %arg2[%c0_1, %c0_2] : memref<8x32xf32, #tpu.memory_space<vmem>>, vector<8x32xf32>
    %cst = arith.constant dense<0.000000e+00> : vector<8x32xf32>
    %2 = tpu.matmul %0, %1, %cst {dimension_numbers = #tpu.dot_dimension_numbers<[1], [0], [0], [1], [0, 0, 1, 1], [], []>} : vector<8x8xf32>, vector<8x32xf32>, vector<8x32xf32> -> vector<8x32xf32>
    %c0_3 = arith.constant 0 : index
    %c0_4 = arith.constant 0 : index
    %3 = vector.load %arg3[%c0_3, %c0_4] : memref<1x32xf32, #tpu.memory_space<vmem>>, vector<1x32xf32>
    %4 = vector.broadcast %3 : vector<1x32xf32> to vector<8x32xf32>
    %5 = arith.addf %2, %4 : vector<8x32xf32>
    %cst_5 = arith.constant 0.000000e+00 : f32
    %6 = vector.broadcast %cst_5 : f32 to vector<8x32xf32>
    %7 = arith.maximumf %5, %6 : vector<8x32xf32>
    %c0_6 = arith.constant 0 : index
    %c0_7 = arith.constant 0 : index
    %8 = vector.load %arg4[%c0_6, %c0_7] : memref<32x32xf32, #tpu.memory_space<vmem>>, vector<32x32xf32>
    %cst_8 = arith.constant dense<0.000000e+00> : vector<8x32xf32>
    %9 = tpu.matmul %7, %8, %cst_8 {dimension_numbers = #tpu.dot_dimension_numbers<[1], [0], [0], [1], [0, 0, 1, 1], [], []>} : vector<8x32xf32>, vector<32x32xf32>, vector<8x32xf32> -> vector<8x32xf32>
    %c0_9 = arith.constant 0 : index
    %c0_10 = arith.constant 0 : index
    %10 = vector.load %arg5[%c0_9, %c0_10] : memref<1x32xf32, #tpu.memory_space<vmem>>, vector<1x32xf32>
    %11 = vector.broadcast %10 : vector<1x32xf32> to vector<8x32xf32>
    %12 = arith.addf %9, %11 : vector<8x32xf32>
    %cst_11 = arith.constant 0.000000e+00 : f32
    %13 = vector.broadcast %cst_11 : f32 to vector<8x32xf32>
    %14 = arith.maximumf %12, %13 : vector<8x32xf32>
    %c0_12 = arith.constant 0 : index
    %c0_13 = arith.constant 0 : index
    %15 = vector.load %arg6[%c0_12, %c0_13] : memref<32x4xf32, #tpu.memory_space<vmem>>, vector<32x4xf32>
    %cst_14 = arith.constant dense<0.000000e+00> : vector<8x4xf32>
    %16 = tpu.matmul %14, %15, %cst_14 {dimension_numbers = #tpu.dot_dimension_numbers<[1], [0], [0], [1], [0, 0, 1, 1], [], []>} : vector<8x32xf32>, vector<32x4xf32>, vector<8x4xf32> -> vector<8x4xf32>
    %c0_15 = arith.constant 0 : index
    %c0_16 = arith.constant 0 : index
    %17 = vector.load %arg7[%c0_15, %c0_16] : memref<1x4xf32, #tpu.memory_space<vmem>>, vector<1x4xf32>
    %18 = vector.broadcast %17 : vector<1x4xf32> to vector<8x4xf32>
    %19 = arith.addf %16, %18 : vector<8x4xf32>
    %c0_17 = arith.constant 0 : index
    %c0_18 = arith.constant 0 : index
    %20 = vector.load %arg8[%c0_17, %c0_18] : memref<8x4xf32, #tpu.memory_space<vmem>>, vector<8x4xf32>
    tpu.vector_store %arg8[%c0_17, %c0_18], %19 {strides = array<i32>} : memref<8x4xf32, #tpu.memory_space<vmem>>, vector<8x4xf32>,
    return
  }
  func.func @transform_0(%arg0: i32) -> (i32, i32) {
    %c0_i32 = arith.constant 0 : i32
    %c0_i32_0 = arith.constant 0 : i32
    return %arg0, %c0_i32 : i32, i32
  }
  func.func @transform_1(%arg0: i32) -> (i32, i32) {
    %c0_i32 = arith.constant 0 : i32
    %c0_i32_0 = arith.constant 0 : i32
    %c0_i32_1 = arith.constant 0 : i32
    return %c0_i32, %c0_i32_0 : i32, i32
  }
  func.func @transform_2(%arg0: i32) -> (i32, i32) {
    %c0_i32 = arith.constant 0 : i32
    %c0_i32_0 = arith.constant 0 : i32
    %c0_i32_1 = arith.constant 0 : i32
    return %c0_i32, %c0_i32_0 : i32, i32
  }
  func.func @transform_3(%arg0: i32) -> (i32, i32) {
    %c0_i32 = arith.constant 0 : i32
    %c0_i32_0 = arith.constant 0 : i32
    %c0_i32_1 = arith.constant 0 : i32
    return %c0_i32, %c0_i32_0 : i32, i32
  }
  func.func @transform_4(%arg0: i32) -> (i32, i32) {
    %c0_i32 = arith.constant 0 : i32
    %c0_i32_0 = arith.constant 0 : i32
    %c0_i32_1 = arith.constant 0 : i32
    return %c0_i32, %c0_i32_0 : i32, i32
  }
  func.func @transform_5(%arg0: i32) -> (i32, i32) {
    %c0_i32 = arith.constant 0 : i32
    %c0_i32_0 = arith.constant 0 : i32
    %c0_i32_1 = arith.constant 0 : i32
    return %c0_i32, %c0_i32_0 : i32, i32
  }
  func.func @transform_6(%arg0: i32) -> (i32, i32) {
    %c0_i32 = arith.constant 0 : i32
    %c0_i32_0 = arith.constant 0 : i32
    %c0_i32_1 = arith.constant 0 : i32
    return %c0_i32, %c0_i32_0 : i32, i32
  }
  func.func @transform_7(%arg0: i32) -> (i32, i32) {
    %c0_i32 = arith.constant 0 : i32
    %c0_i32_0 = arith.constant 0 : i32
    return %arg0, %c0_i32 : i32, i32
  }
}

</mosaic_0001>

<llo_original>
// kernel: _pallas_forward.1
$region0: #{_pallas_forward.1}
  #allocation0 [shape = 'u32[]', space=smem, size = 0x4, offset = 0x4, fixed_abs, tag = 'smem constant byte address 0x4 - core index']
  #allocation1 [shape = 'u32[144,128]{1,0:T(1,128)}', space=vmem, size = 0x12000, scoped, tag = 'internal scratch']
  %s0 = inlined_call_operand.vmem [shape: f32[8,8], index: 0, kind: input, shape index: {}]
  %s1 = inlined_call_operand.vmem [shape: f32[8,32], index: 1, kind: input, shape index: {}]
  %s2 = inlined_call_operand.vmem [shape: f32[1,32], index: 2, kind: input, shape index: {}]
  %s3 = inlined_call_operand.vmem [shape: f32[32,32], index: 3, kind: input, shape index: {}]
  %s4 = inlined_call_operand.vmem [shape: f32[1,32], index: 4, kind: input, shape index: {}]
  %s5 = inlined_call_operand.vmem [shape: f32[32,4], index: 5, kind: input, shape index: {}]
  %s6 = inlined_call_operand.vmem [shape: f32[1,4], index: 6, kind: input, shape index: {}]
  %s7 = inlined_call_operand.vmem [shape: f32[8,4], index: 7, kind: output, shape index: {}]
  %s8 = sld [smem:[#allocation0]]
  $region38: #{_pallas_forward.1} parent=0
    _
  %s10 = ssub.s32 1, %s8
  %s11 = scalar_select 0, %s10, %s8
  // Predicated region
  $region2: #{_pallas_forward.1} parent=0 // pred_check
    _
  $region3: #{_pallas_forward.1} parent=0 // pred_check_branch
    %13 = sbr.rel (0) target = $region5
  $region4: #{_pallas_forward.1} parent=0 // pred_region
    _
  $region5: #{_pallas_forward.1} parent=0 // pred_fallthru
    _
  // Predicated region
  $region6: #{_pallas_forward.1} parent=0 // pred_check
    _
  $region7: #{_pallas_forward.1} parent=0 // pred_check_branch
    %15 = sbr.rel (0) target = $region9
  $region8: #{_pallas_forward.1} parent=0 // pred_region
    _
  $region9: #{_pallas_forward.1} parent=0 // pred_fallthru
    _
  // Predicated region
  $region10: #{_pallas_forward.1} parent=0 // pred_check
    _
  $region11: #{_pallas_forward.1} parent=0 // pred_check_branch
    %17 = sbr.rel (0) target = $region13
  $region12: #{_pallas_forward.1} parent=0 // pred_region
    _
  $region13: #{_pallas_forward.1} parent=0 // pred_fallthru
    _
  // Predicated region
  $region14: #{_pallas_forward.1} parent=0 // pred_check
    _
  $region15: #{_pallas_forward.1} parent=0 // pred_check_branch
    %19 = sbr.rel (0) target = $region17
  $region16: #{_pallas_forward.1} parent=0 // pred_region
    _
  $region17: #{_pallas_forward.1} parent=0 // pred_fallthru
    _
  // Predicated region
  $region18: #{_pallas_forward.1} parent=0 // pred_check
    _
  $region19: #{_pallas_forward.1} parent=0 // pred_check_branch
    %21 = sbr.rel (0) target = $region21
  $region20: #{_pallas_forward.1} parent=0 // pred_region
    _
  $region21: #{_pallas_forward.1} parent=0 // pred_fallthru
    _
  // Predicated region
  $region22: #{_pallas_forward.1} parent=0 // pred_check
    _
  $region23: #{_pallas_forward.1} parent=0 // pred_check_branch
    %23 = sbr.rel (0) target = $region25
  $region24: #{_pallas_forward.1} parent=0 // pred_region
    _
  $region25: #{_pallas_forward.1} parent=0 // pred_fallthru
    _
  // Predicated region
  $region26: #{_pallas_forward.1} parent=0 // pred_check
    _
  $region27: #{_pallas_forward.1} parent=0 // pred_check_branch
    %25 = sbr.rel (0) target = $region29
  $region28: #{_pallas_forward.1} parent=0 // pred_region
    _
  $region29: #{_pallas_forward.1} parent=0 // pred_fallthru
    _
  %v26 = vld [vmem:[%s0] sm:$0xff]
  %v27 = vld [vmem:[%s1] sm:$0xff]
  %v28 = vld [vmem:[%s2] sm:$0x1]
  %v30 = vlaneseq
  %v31 = vshrl.u32 %v30, 7
  %v32 = vsub.s32 0, %v31
  %v33 = vrot.slane %v28, %v32
  %vm35 = vcmask 64512
  %v37 = vsel %vm35, %v26, 0
  %39 = vmatprep.subr.mxu0 0.0
  %40 = vmatpush1.msra.mxu0 %v27
  %41 = vmatprep.subr.mxu0 0.0
  %42 = vmatpush1.msra.mxu0 0.0
  %43 = vmatprep.subr.mxu0 0.0
  %44 = vmatpush1.msra.mxu0 0.0
  %45 = vmatprep.subr.mxu0 0.0
  %46 = vmatpush1.msra.mxu0 0.0
  %47 = vmatprep.subr.mxu0 0.0
  %48 = vmatpush1.msra.mxu0 0.0
  %49 = vmatprep.subr.mxu0 0.0
  %50 = vmatpush1.msra.mxu0 0.0
  %51 = vmatprep.subr.mxu0 0.0
  %52 = vmatpush1.msra.mxu0 0.0
  %53 = vmatprep.subr.mxu0 0.0
  %54 = vmatpush1.msra.mxu0 0.0
  %55 = vmatprep.subr.mxu0 0.0
  %56 = vmatpush1.msra.mxu0 0.0
  %57 = vmatprep.subr.mxu0 0.0
  %58 = vmatpush1.msra.mxu0 0.0
  %59 = vmatprep.subr.mxu0 0.0
  %60 = vmatpush1.msra.mxu0 0.0
  %61 = vmatprep.subr.mxu0 0.0
  %62 = vmatpush1.msra.mxu0 0.0
  %63 = vmatprep.subr.mxu0 0.0
  %64 = vmatpush1.msra.mxu0 0.0
  %65 = vmatprep.subr.mxu0 0.0
  %66 = vmatpush1.msra.mxu0 0.0
  %67 = vmatprep.subr.mxu0 0.0
  %68 = vmatpush1.msra.mxu0 0.0
  %69 = vmatprep.subr.mxu0 0.0
  %70 = vmatpush1.msra.mxu0 0.0
  %71 = vmatprep.subr.mxu0 0.0
  %72 = vmatpush1.msra.mxu0 0.0
  %73 = vmatprep.subr.mxu0 0.0
  %74 = vmatpush1.msra.mxu0 0.0
  %75 = vmatprep.subr.mxu0 0.0
  %76 = vmatpush1.msra.mxu0 0.0
  %77 = vmatprep.subr.mxu0 0.0
  %78 = vmatpush1.msra.mxu0 0.0
  %79 = vmatprep.subr.mxu0 0.0
  %80 = vmatpush1.msra.mxu0 0.0
  %81 = vmatprep.subr.mxu0 0.0
  %82 = vmatpush1.msra.mxu0 0.0
  %83 = vmatprep.subr.mxu0 0.0
  %84 = vmatpush1.msra.mxu0 0.0
  %85 = vmatprep.subr.mxu0 0.0
  %86 = vmatpush1.msra.mxu0 0.0
  %87 = vmatprep.subr.mxu0 0.0
  %88 = vmatpush1.msra.mxu0 0.0
  %89 = vmatprep.subr.mxu0 0.0
  %90 = vmatpush1.msra.mxu0 0.0
  %91 = vmatprep.subr.mxu0 0.0
  %92 = vmatpush1.msra.mxu0 0.0
  %93 = vmatprep.subr.mxu0 0.0
  %94 = vmatpush1.msra.mxu0 0.0
  %95 = vmatprep.subr.mxu0 0.0
  %96 = vmatpush1.msra.mxu0 0.0
  %97 = vmatprep.subr.mxu0 0.0
  %98 = vmatpush1.msra.mxu0 0.0
  %99 = vmatprep.subr.mxu0 0.0
  %100 = vmatpush1.msra.mxu0 0.0
  %101 = vmatprep.subr.mxu0 0.0
  %102 = vmatpush1.msra.mxu0 0.0
  %103 = vmatprep.mubr.f32.mxu0 0.0
  %104 = vmatmul.mubr.f32.gmra.mrb[0].mxu0 %v37
  %v105 = vpop.f32.mrb[0].mxu0
  %v106 = vadd.f32 %v33, %v105
  %v107 = vpop.f32.mrb[0].mxu0
  %108 = vdwg.mxu0
  %v109 = vmax.f32 %v106, 0.0
  %v110 = vld [vmem:[%s3] sm:$0xff]
  %v111 = vld [vmem:[%s3 + $0x8] sm:$0xff]
  %v112 = vld [vmem:[%s3 + $0x10] sm:$0xff]
  %v113 = vld [vmem:[%s3 + $0x18] sm:$0xff]
  %v114 = vld [vmem:[%s4] sm:$0x1]
  %v116 = vlaneseq
  %v117 = vshrl.u32 %v116, 7
  %v118 = vsub.s32 0, %v117
  %v119 = vrot.slane %v114, %v118
  %vm121 = vcmask 261120
  %v123 = vsel %vm121, %v109, 0
  %125 = vmatprep.subr.mxu0 0.0
  %126 = vmatpush1.msra.mxu0 %v110
  %127 = vmatprep.subr.mxu0 0.0
  %128 = vmatpush1.msra.mxu0 %v111
  %129 = vmatprep.subr.mxu0 0.0
  %130 = vmatpush1.msra.mxu0 %v112
  %131 = vmatprep.subr.mxu0 0.0
  %132 = vmatpush1.msra.mxu0 %v113
  %133 = vmatprep.subr.mxu0 0.0
  %134 = vmatpush1.msra.mxu0 0.0
  %135 = vmatprep.subr.mxu0 0.0
  %136 = vmatpush1.msra.mxu0 0.0
  %137 = vmatprep.subr.mxu0 0.0
  %138 = vmatpush1.msra.mxu0 0.0
  %139 = vmatprep.subr.mxu0 0.0
  %140 = vmatpush1.msra.mxu0 0.0
  %141 = vmatprep.subr.mxu0 0.0
  %142 = vmatpush1.msra.mxu0 0.0
  %143 = vmatprep.subr.mxu0 0.0
  %144 = vmatpush1.msra.mxu0 0.0
  %145 = vmatprep.subr.mxu0 0.0
  %146 = vmatpush1.msra.mxu0 0.0
  %147 = vmatprep.subr.mxu0 0.0
  %148 = vmatpush1.msra.mxu0 0.0
  %149 = vmatprep.subr.mxu0 0.0
  %150 = vmatpush1.msra.mxu0 0.0
  %151 = vmatprep.subr.mxu0 0.0
  %152 = vmatpush1.msra.mxu0 0.0
  %153 = vmatprep.subr.mxu0 0.0
  %154 = vmatpush1.msra.mxu0 0.0
  %155 = vmatprep.subr.mxu0 0.0
  %156 = vmatpush1.msra.mxu0 0.0
  %157 = vmatprep.subr.mxu0 0.0
  %158 = vmatpush1.msra.mxu0 0.0
  %159 = vmatprep.subr.mxu0 0.0
  %160 = vmatpush1.msra.mxu0 0.0
  %161 = vmatprep.subr.mxu0 0.0
  %162 = vmatpush1.msra.mxu0 0.0
  %163 = vmatprep.subr.mxu0 0.0
  %164 = vmatpush1.msra.mxu0 0.0
  %165 = vmatprep.subr.mxu0 0.0
  %166 = vmatpush1.msra.mxu0 0.0
  %167 = vmatprep.subr.mxu0 0.0
  %168 = vmatpush1.msra.mxu0 0.0
  %169 = vmatprep.subr.mxu0 0.0
  %170 = vmatpush1.msra.mxu0 0.0
  %171 = vmatprep.subr.mxu0 0.0
  %172 = vmatpush1.msra.mxu0 0.0
  %173 = vmatprep.subr.mxu0 0.0
  %174 = vmatpush1.msra.mxu0 0.0
  %175 = vmatprep.subr.mxu0 0.0
  %176 = vmatpush1.msra.mxu0 0.0
  %177 = vmatprep.subr.mxu0 0.0
  %178 = vmatpush1.msra.mxu0 0.0
  %179 = vmatprep.subr.mxu0 0.0
  %180 = vmatpush1.msra.mxu0 0.0
  %181 = vmatprep.subr.mxu0 0.0
  %182 = vmatpush1.msra.mxu0 0.0
  %183 = vmatprep.subr.mxu0 0.0
  %184 = vmatpush1.msra.mxu0 0.0
  %185 = vmatprep.subr.mxu0 0.0
  %186 = vmatpush1.msra.mxu0 0.0
  %187 = vmatprep.subr.mxu0 0.0
  %188 = vmatpush1.msra.mxu0 0.0
  %189 = vmatprep.mubr.f32.mxu0 0.0
  %190 = vmatmul.mubr.f32.gmra.mrb[0].mxu0 %v123
  %v191 = vpop.f32.mrb[0].mxu0
  %v192 = vadd.f32 %v119, %v191
  %v193 = vpop.f32.mrb[0].mxu0
  %194 = vdwg.mxu0
  %v195 = vmax.f32 %v192, 0.0
  %v196 = vld [vmem:[%s5] sm:$0xff]
  %v197 = vld [vmem:[%s5 + $0x8] sm:$0xff]
  %v198 = vld [vmem:[%s5 + $0x10] sm:$0xff]
  %v199 = vld [vmem:[%s5 + $0x18] sm:$0xff]
  %v200 = vld [vmem:[%s6] sm:$0x1]
  %v202 = vlaneseq
  %v203 = vshrl.u32 %v202, 7
  %v204 = vsub.s32 0, %v203
  %v205 = vrot.slane %v200, %v204
  %v208 = vsel %vm121, %v195, 0
  %210 = vmatprep.subr.mxu0 0.0
  %211 = vmatpush1.msra.mxu0 %v196
  %212 = vmatprep.subr.mxu0 0.0
  %213 = vmatpush1.msra.mxu0 %v197
  %214 = vmatprep.subr.mxu0 0.0
  %215 = vmatpush1.msra.mxu0 %v198
  %216 = vmatprep.subr.mxu0 0.0
  %217 = vmatpush1.msra.mxu0 %v199
  %218 = vmatprep.subr.mxu0 0.0
  %219 = vmatpush1.msra.mxu0 0.0
  %220 = vmatprep.subr.mxu0 0.0
  %221 = vmatpush1.msra.mxu0 0.0
  %222 = vmatprep.subr.mxu0 0.0
  %223 = vmatpush1.msra.mxu0 0.0
  %224 = vmatprep.subr.mxu0 0.0
  %225 = vmatpush1.msra.mxu0 0.0
  %226 = vmatprep.subr.mxu0 0.0
  %227 = vmatpush1.msra.mxu0 0.0
  %228 = vmatprep.subr.mxu0 0.0
  %229 = vmatpush1.msra.mxu0 0.0
  %230 = vmatprep.subr.mxu0 0.0
  %231 = vmatpush1.msra.mxu0 0.0
  %232 = vmatprep.subr.mxu0 0.0
  %233 = vmatpush1.msra.mxu0 0.0
  %234 = vmatprep.subr.mxu0 0.0
  %235 = vmatpush1.msra.mxu0 0.0
  %236 = vmatprep.subr.mxu0 0.0
  %237 = vmatpush1.msra.mxu0 0.0
  %238 = vmatprep.subr.mxu0 0.0
  %239 = vmatpush1.msra.mxu0 0.0
  %240 = vmatprep.subr.mxu0 0.0
  %241 = vmatpush1.msra.mxu0 0.0
  %242 = vmatprep.subr.mxu0 0.0
  %243 = vmatpush1.msra.mxu0 0.0
  %244 = vmatprep.subr.mxu0 0.0
  %245 = vmatpush1.msra.mxu0 0.0
  %246 = vmatprep.subr.mxu0 0.0
  %247 = vmatpush1.msra.mxu0 0.0
  %248 = vmatprep.subr.mxu0 0.0
  %249 = vmatpush1.msra.mxu0 0.0
  %250 = vmatprep.subr.mxu0 0.0
  %251 = vmatpush1.msra.mxu0 0.0
  %252 = vmatprep.subr.mxu0 0.0
  %253 = vmatpush1.msra.mxu0 0.0
  %254 = vmatprep.subr.mxu0 0.0
  %255 = vmatpush1.msra.mxu0 0.0
  %256 = vmatprep.subr.mxu0 0.0
  %257 = vmatpush1.msra.mxu0 0.0
  %258 = vmatprep.subr.mxu0 0.0
  %259 = vmatpush1.msra.mxu0 0.0
  %260 = vmatprep.subr.mxu0 0.0
  %261 = vmatpush1.msra.mxu0 0.0
  %262 = vmatprep.subr.mxu0 0.0
  %263 = vmatpush1.msra.mxu0 0.0
  %264 = vmatprep.subr.mxu0 0.0
  %265 = vmatpush1.msra.mxu0 0.0
  %266 = vmatprep.subr.mxu0 0.0
  %267 = vmatpush1.msra.mxu0 0.0
  %268 = vmatprep.subr.mxu0 0.0
  %269 = vmatpush1.msra.mxu0 0.0
  %270 = vmatprep.subr.mxu0 0.0
  %271 = vmatpush1.msra.mxu0 0.0
  %272 = vmatprep.subr.mxu0 0.0
  %273 = vmatpush1.msra.mxu0 0.0
  %274 = vmatprep.mubr.f32.mxu0 0.0
  %275 = vmatmul.mubr.f32.gmra.mrb[0].mxu0 %v208
  %v276 = vpop.f32.mrb[0].mxu0
  %v277 = vadd.f32 %v205, %v276
  %v278 = vpop.f32.mrb[0].mxu0
  %279 = vdwg.mxu0
  %vm280 = vcmask 31744
  %281 = vst.msk [vmem:[%s7] sm:$0xff] %vm280, %v277
  // Predicated region
  $region30: #{_pallas_forward.1} parent=0 // pred_check
    _
  $region31: #{_pallas_forward.1} parent=0 // pred_check_branch
    %283 = sbr.rel (0) target = $region33
  $region32: #{_pallas_forward.1} parent=0 // pred_region
    _
  $region33: #{_pallas_forward.1} parent=0 // pred_fallthru
    _
  // Predicated region
  $region34: #{_pallas_forward.1} parent=0 // pred_check
    _
  $region35: #{_pallas_forward.1} parent=0 // pred_check_branch
    %285 = sbr.rel (0) target = $region37
  $region36: #{_pallas_forward.1} parent=0 // pred_region
    _
  $region37: #{_pallas_forward.1} parent=0 // pred_fallthru
    _

</llo_original>
